<compile_context>
chip_gen: v7x
topology: tpu7x:2x2x1
jax: 0.10.0
libtpu: 0.0.40
codegen_flags: <defaults>
</compile_context>

<pallas_src>
import jax
import jax.numpy as jnp
from jax.experimental import pallas as pl
from jax.experimental.pallas import tpu as pltpu


def _attentive_kernel(x_ref, w_ref, o_ref):
    # Hot path: per-column scale on the VPU, staying in the input dtype.
    # x_ref: (tm, tn) tile; w_ref: (1, tn) row, broadcast over the sublane axis.
    o_ref[...] = x_ref[...] * w_ref[...]


def _cdiv(a, b):
    return (a + b - 1) // b


def _round_up(x, m):
    return ((x + m - 1) // m) * m


def _sublane_multiple(dtype):
    # Packed sub-32-bit dtypes need 16 (2-byte) / 32 (1-byte) rows per tile.
    itemsize = jnp.dtype(dtype).itemsize
    return {4: 8, 2: 16, 1: 32}.get(itemsize, 8)


def attentive_forward(x, w, *, tm=None, tn=None, vmem_limit_bytes=None,
                      min_kernel_bytes=1 << 20):
    """y = x @ diag(w), computed as a Pallas TPU kernel.

    x: [..., D] array, w: [D] array (the nn.Parameter of Attentive).
    tm / tn: optional row / lane tile overrides (auto-tuned otherwise).
    min_kernel_bytes: below this input size, use a plain fused XLA multiply.
    """
    orig_shape = x.shape
    D = orig_shape[-1]
    assert w.shape == (D,)
    # NOTE: torch matmul requires matching dtypes, so casting w to x.dtype keeps
    # parity with the PyTorch module (which is f32 in, f32 out by default).
    w = w.astype(x.dtype)
    x2 = x.reshape(-1, D)                      # free: collapses leading dims
    N = x2.shape[0]
    itemsize = jnp.dtype(x.dtype).itemsize

    # Tiny problems: kernel launch + pipeline prologue dwarf the actual work.
    if N * D * itemsize < min_kernel_bytes:
        return (x2 * w[None, :]).reshape(orig_shape)

    sub = _sublane_multiple(x.dtype)
    MAX_TILE_BYTES = 8 << 20                   # ~8 MiB tiles: <4% per-step overhead

    # ---- lane (last-dim) tiling: lane-dense (multiple of 128). Prefer covering
    # the whole feature dim in one slab so the grid collapses to 1-D over rows
    # and w is loaded exactly once. Only tile lanes for extreme D.
    D128 = _round_up(D, 128)
    if tn is None:
        max_lane = max(128, ((MAX_TILE_BYTES // sub) // itemsize) // 128 * 128)
        tn = min(D128, max_lane)
    else:
        tn = max(128, _round_up(tn, 128))
    n_col = _cdiv(D, tn)

    # ---- row tiling: fill the byte budget; guarantee enough grid blocks for
    # v7x dual-TC sharding and DMA/compute pipelining.
    if tm is None:
        tm = max(sub, (MAX_TILE_BYTES // (tn * itemsize)) // sub * sub)
    else:
        tm = max(sub, _round_up(tm, sub))
    if n_col == 1:
        min_row_blocks = 4                     # >= 2 per TensorCore on v7x
        if _cdiv(N, tm) < min_row_blocks:
            tm = max(sub, _round_up(_cdiv(N, min_row_blocks), sub))
    tm = min(tm, _round_up(N, sub))            # don't tile past the data
    n_row = _cdiv(N, tm)

    w2d = w.reshape(1, D)

    # ---- VMEM budget: double-buffered in + out tiles, resident w row, headroom.
    # Clamp to <= 56 MiB so the request is always valid on v7x (64 MiB VMEM).
    if vmem_limit_bytes is None:
        tile_bytes = tm * tn * itemsize
        needed = 4 * tile_bytes + 2 * tn * itemsize + (2 << 20)
        vmem_limit_bytes = int(min(max(needed, 32 << 20), 56 << 20))

    out_shape = jax.ShapeDtypeStruct((N, D), x.dtype)

    if n_col == 1:
        # 1-D grid over row tiles; w block index is constant -> fetched once,
        # stays resident in VMEM for the whole kernel.
        grid_spec = pltpu.PrefetchScalarGridSpec(
            num_scalar_prefetch=0,
            grid=(n_row,),
            in_specs=[
                pl.BlockSpec((tm, tn), lambda i: (i, 0)),
                pl.BlockSpec((1, tn), lambda i: (0, 0)),
            ],
            out_specs=pl.BlockSpec((tm, tn), lambda i: (i, 0)),
        )
        dim_sem = ("parallel",)
    else:
        # Column axis outermost so the (1, tn) w block index is unchanged across
        # all inner row steps (no redundant w DMA on a bandwidth-bound kernel).
        grid_spec = pltpu.PrefetchScalarGridSpec(
            num_scalar_prefetch=0,
            grid=(n_col, n_row),
            in_specs=[
                pl.BlockSpec((tm, tn), lambda c, r: (r, c)),
                pl.BlockSpec((1, tn), lambda c, r: (0, c)),
            ],
            out_specs=pl.BlockSpec((tm, tn), lambda c, r: (r, c)),
        )
        dim_sem = ("parallel", "parallel")

    y = pl.pallas_call(
        _attentive_kernel,
        out_shape=out_shape,
        grid_spec=grid_spec,
        compiler_params=pltpu.CompilerParams(
            dimension_semantics=dim_sem,
            vmem_limit_bytes=vmem_limit_bytes,
        ),
    )(x2, w2d)

    return y.reshape(orig_shape)


if __name__ == "__main__":
    key = jax.random.PRNGKey(0)
    k1, k2, k3, k4 = jax.random.split(key, 4)

    # Case 1: canonical Attentive shapes: x is [N, size], w = ones(size).
    N, size = 16, 128
    x = jax.random.normal(k1, (N, size), dtype=jnp.float32)
    w = jnp.ones((size,), dtype=jnp.float32)
    y = jax.block_until_ready(attentive_forward(x, w, min_kernel_bytes=0))
    y_ref = x * w[None, :]                     # == x @ diag(w), without O(N*D^2)
    assert jnp.allclose(y, y_ref, atol=1e-6, rtol=1e-6), "mismatch (case 1)"

    # Case 2: ragged last dim (not a multiple of 128) exercises masked boundary
    # blocks -- no padding or slicing passes over HBM.
    N2, size2 = 24, 100
    x2 = jax.random.normal(k2, (N2, size2), dtype=jnp.float32)
    w2 = jax.random.normal(k3, (size2,), dtype=jnp.float32)
    y2 = jax.block_until_ready(attentive_forward(x2, w2, min_kernel_bytes=0))
    assert jnp.allclose(y2, x2 * w2[None, :], atol=1e-6, rtol=1e-6), "mismatch (case 2)"

    # Case 3: force the 2-D (column-outer) grid path with a lane-tile override.
    N3, size3 = 32, 256
    x3 = jax.random.normal(k4, (N3, size3), dtype=jnp.float32)
    w3 = jnp.linspace(-1.0, 1.0, size3, dtype=jnp.float32)
    y3 = jax.block_until_ready(attentive_forward(x3, w3, tn=128, min_kernel_bytes=0))
    assert jnp.allclose(y3, x3 * w3[None, :], atol=1e-6, rtol=1e-6), "mismatch (case 3)"

    print("KERNEL_OK")
</pallas_src>

<mosaic_0001>
module attributes {stable_mosaic.version = 11 : i64} {
  func.func @_attentive_kernel(%arg0: i32, %arg1: memref<8x128xf32, #tpu.memory_space<vmem>>, %arg2: memref<1x128xf32, #tpu.memory_space<vmem>>, %arg3: memref<8x128xf32, #tpu.memory_space<vmem>>) attributes {dimension_semantics = [#tpu.dimension_semantics<parallel>], iteration_bounds = array<i64: 2>, scalar_prefetch = 0 : i64, scratch_operands = 0 : i64, tpu.core_type = #tpu.core_type<tc>, window_params = [{transform_indices = @transform_0, window_bounds = array<i64: 8, 128>}, {pipeline_mode = #tpu.pipeline_mode<synchronous>, transform_indices = @transform_1, window_bounds = array<i64: 1, 128>}, {transform_indices = @transform_2, window_bounds = array<i64: 8, 128>}]} {
    %c0 = arith.constant 0 : index
    %c0_0 = arith.constant 0 : index
    %0 = vector.load %arg1[%c0, %c0_0] : memref<8x128xf32, #tpu.memory_space<vmem>>, vector<8x128xf32>
    %c0_1 = arith.constant 0 : index
    %c0_2 = arith.constant 0 : index
    %1 = vector.load %arg2[%c0_1, %c0_2] : memref<1x128xf32, #tpu.memory_space<vmem>>, vector<1x128xf32>
    %2 = vector.broadcast %1 : vector<1x128xf32> to vector<8x128xf32>
    %3 = arith.mulf %0, %2 : vector<8x128xf32>
    %c0_3 = arith.constant 0 : index
    %c0_4 = arith.constant 0 : index
    %4 = vector.load %arg3[%c0_3, %c0_4] : memref<8x128xf32, #tpu.memory_space<vmem>>, vector<8x128xf32>
    tpu.vector_store %arg3[%c0_3, %c0_4], %3 {strides = array<i32>} : memref<8x128xf32, #tpu.memory_space<vmem>>, vector<8x128xf32>,
    return
  }
  func.func @transform_0(%arg0: i32) -> (i32, i32) {
    %c0_i32 = arith.constant 0 : i32
    %c0_i32_0 = arith.constant 0 : i32
    return %arg0, %c0_i32 : i32, i32
  }
  func.func @transform_1(%arg0: i32) -> (i32, i32) {
    %c0_i32 = arith.constant 0 : i32
    %c0_i32_0 = arith.constant 0 : i32
    %c0_i32_1 = arith.constant 0 : i32
    return %c0_i32, %c0_i32_0 : i32, i32
  }
  func.func @transform_2(%arg0: i32) -> (i32, i32) {
    %c0_i32 = arith.constant 0 : i32
    %c0_i32_0 = arith.constant 0 : i32
    return %arg0, %c0_i32 : i32, i32
  }
}

</mosaic_0001>

<llo_original>
// kernel: tpu_custom_call.1
$region0: #{tpu_custom_call.1}
  #allocation0 [shape = 'u32[]', space=smem, size = 0x4, offset = 0x4, fixed_abs, tag = 'smem constant byte address 0x4 - core index']
  #allocation1 [shape = 'u32[144,128]{1,0:T(1,128)}', space=vmem, size = 0x12000, scoped, tag = 'internal scratch']
  %s0 = inlined_call_operand.hbm [shape: f32[16,128], index: 0, kind: input, shape index: {}]
  %s1 = inlined_call_operand.vmem [shape: f32[1,128], index: 1, kind: input, shape index: {}]
  %s2 = inlined_call_operand.hbm [shape: f32[16,128], index: 2, kind: output, shape index: {}]
  %s3 = sld [smem:[#allocation0]]
  $region45: #{tpu_custom_call.1} parent=0
    _
  %s5 = ssub.s32 1, %s3
  %s6 = scalar_select 0, %s5, %s3
  $region1: #{tpu_custom_call.1} parent=0
    #allocation2 [shape = 'u8[8192]{0}', space=vmem, size = 0x2000, scoped, tag = 'input window, operand 0']
    #allocation3 [shape = 's32[2]{0}', space=sflag, size = 0x8, scoped, tag = 'scoped memory for tpu_custom_call.1']
    #allocation4 [shape = 's32[2]{0}', space=sflag, size = 0x8, scoped, tag = 'scoped memory for tpu_custom_call.1']
    #allocation5 [shape = 'u8[8192]{0}', space=vmem, size = 0x2000, scoped, tag = 'output window, operand 0']
    %7 = vsyncpa [#allocation3], 0
    %s8 = scalar_lea.sflag [#allocation3], 1
    %9 = vsyncpa %s8, 0
    %10 = vsyncpa [#allocation4], 0
    %s11 = scalar_lea.sflag [#allocation4], 1
    %12 = vsyncpa %s11, 0
    loop: start=0, step=1, limit=4
    $region2: #{tpu_custom_call.1} parent=1 // loop_pre_header
      _
    $region3: #{tpu_custom_call.1} parent=1 // loop_header
      %s14 = sphi 0, %s18
      %p15 = scmp.ge.s32.totalorder %s14, 4
      %s24 = sphi 0, %s26
      %s27 = sphi 0, %s24
      %s28 = sphi 0, %s27
      %s44 = sphi 0, %s28
      %s48 = sphi 0, %s48
      %s50 = sphi 0, %s48
      %s51 = sphi 0, %s50
      %s65 = sphi 0, %s51
      %s71 = sphi 0, %s73
      %s74 = sphi 0, %s71
      %s75 = sphi 0, %s74
      %s91 = sphi 0, %s75
    $region4: #{tpu_custom_call.1} parent=1 // loop_header_branch
      %17 = sbr.rel (%p15) target = $region8
    $region5: #{tpu_custom_call.1} parent=1 // loop_body
      %s19 = ssub.s32 %s14, 1
      %s20 = ssub.s32 %s14, 2
      %s21 = sadd.s32 %s14, 1
      %s22 = ssub.s32 %s14, %s21
      %p23 = scmp.eq.s32.totalorder %s22, 0
      %s25 = sadd.s32 %s24, 1
      %s26 = scalar_select %p23, %s24, %s25
      %p29 = pneg %p23
      %p30 = scmp.eq.s32.totalorder %s14, 1
      %p31 = por %p29, %p30
      %p32 = scmp.ne.s32.totalorder %s24, %s27
      %p33 = scmp.eq.s32.totalorder %s14, 0
      %p34 = por %p32, %p33
      %p35 = scmp.ne.s32.totalorder %s24, %s27
      %p36 = scmp.eq.s32.totalorder %s19, 1
      %p37 = por %p35, %p36
      %p38 = scmp.ne.s32.totalorder %s27, %s28
      %p39 = scmp.eq.s32.totalorder %s19, 0
      %p40 = por %p38, %p39
      %p41 = scmp.ne.s32.totalorder %s27, %s28
      %p42 = scmp.eq.s32.totalorder %s20, 1
      %p43 = por %p41, %p42
      %p45 = scmp.ne.s32.totalorder %s28, %s44
      %p46 = scmp.eq.s32.totalorder %s20, 0
      %p47 = por %p45, %p46
      %s49 = sadd.s32 %s48, 1
      %p52 = scmp.eq.s32.totalorder %s14, 1
      %p53 = scmp.ne.s32.totalorder %s48, %s50
      %p54 = scmp.eq.s32.totalorder %s14, 0
      %p55 = por %p53, %p54
      %p56 = scmp.ne.s32.totalorder %s48, %s50
      %p57 = scmp.eq.s32.totalorder %s19, 1
      %p58 = por %p56, %p57
      %p59 = scmp.ne.s32.totalorder %s50, %s51
      %p60 = scmp.eq.s32.totalorder %s19, 0
      %p61 = por %p59, %p60
      %p62 = scmp.ne.s32.totalorder %s50, %s51
      %p63 = scmp.eq.s32.totalorder %s20, 1
      %p64 = por %p62, %p63
      %p66 = scmp.ne.s32.totalorder %s51, %s65
      %p67 = scmp.eq.s32.totalorder %s20, 0
      %p68 = por %p66, %p67
      %s69 = ssub.s32 %s14, %s21
      %p70 = scmp.eq.s32.totalorder %s69, 0
      %s72 = sadd.s32 %s71, 1
      %s73 = scalar_select %p70, %s71, %s72
      %p76 = pneg %p70
      %p77 = scmp.eq.s32.totalorder %s14, 1
      %p78 = por %p76, %p77
      %p79 = scmp.ne.s32.totalorder %s71, %s74
      %p80 = scmp.eq.s32.totalorder %s14, 0
      %p81 = por %p79, %p80
      %p82 = scmp.ne.s32.totalorder %s71, %s74
      %p83 = scmp.eq.s32.totalorder %s19, 1
      %p84 = por %p82, %p83
      %p85 = scmp.ne.s32.totalorder %s74, %s75
      %p86 = scmp.eq.s32.totalorder %s19, 0
      %p87 = por %p85, %p86
      %p88 = scmp.ne.s32.totalorder %s74, %s75
      %p89 = scmp.eq.s32.totalorder %s20, 1
      %p90 = por %p88, %p89
      %p92 = scmp.ne.s32.totalorder %s75, %s91
      %p93 = scmp.eq.s32.totalorder %s20, 0
      %p94 = por %p92, %p93
      %p95 = scmp.le.s32.totalorder 1, %s14
      %p96 = scmp.lt.s32.totalorder %s14, 3
      %p97 = pnand %p95, %p96
      %p98 = pneg %p97
      // Predicated region
      $region9: #{tpu_custom_call.1} parent=5 // pred_check
        _
      $region10: #{tpu_custom_call.1} parent=5 // pred_check_branch
        %100 = sbr.rel (%p97) target = $region12
      $region11: #{tpu_custom_call.1} parent=5 // pred_region
        %s101 = ssub.s32 %s14, 1
        // Predicated region
        $region13: #{tpu_custom_call.1} parent=11 // pred_check
          %p102 = pneg %p61
        $region14: #{tpu_custom_call.1} parent=11 // pred_check_branch
          %104 = sbr.rel (%p102) target = $region16
        $region15: #{tpu_custom_call.1} parent=11 // pred_region
          _
        $region16: #{tpu_custom_call.1} parent=11 // pred_fallthru
          _
      $region12: #{tpu_custom_call.1} parent=5 // pred_fallthru
        _
      %p105 = scmp.lt.s32.totalorder %s14, 2
      // Predicated region
      $region17: #{tpu_custom_call.1} parent=5 // pred_check
        %p106 = pneg %p105
      $region18: #{tpu_custom_call.1} parent=5 // pred_check_branch
        %108 = sbr.rel (%p106) target = $region20
      $region19: #{tpu_custom_call.1} parent=5 // pred_region
        // Predicated region
        $region21: #{tpu_custom_call.1} parent=19 // pred_check
          %p109 = pneg %p34
        $region22: #{tpu_custom_call.1} parent=19 // pred_check_branch
          %111 = sbr.rel (%p109) target = $region24
        $region23: #{tpu_custom_call.1} parent=19 // pred_region
          %s112 = sand.u32 %s24, 1
          %s113 = scalar_lea.sflag [#allocation3], %s112
          %s114 = sand.u32 %s24, 1
          %s115 = smul.addr %s114, 8
          %s116 = scalar_lea.vmem [#allocation2], %s115
          %s118 = ssub.s32 128, 128
          %119 = vsyncadd %s113, %s118
          %s120 = smul.addr %s14, 128
          %s121 = scalar_lea.hbm %s0, %s120
          %s123 = sshll.u32 %s116, 4
          %s124 = int_to_ptr.vmem [resolvable:$true] %s123
          %126 = dma.hbm_to_vmem [thread:$0]  %s121, 128, %s124, %s113
        $region24: #{tpu_custom_call.1} parent=19 // pred_fallthru
          _
      $region20: #{tpu_custom_call.1} parent=5 // pred_fallthru
        _
      %p127 = scmp.le.s32.totalorder 1, %s14
      %p128 = scmp.lt.s32.totalorder %s14, 3
      %p129 = pnand %p127, %p128
      %p130 = pneg %p129
      // Predicated region
      $region25: #{tpu_custom_call.1} parent=5 // pred_check
        _
      $region26: #{tpu_custom_call.1} parent=5 // pred_check_branch
        %132 = sbr.rel (%p129) target = $region28
      $region27: #{tpu_custom_call.1} parent=5 // pred_region
        %s133 = ssub.s32 %s14, 1
        %s134 = sand.u32 %s27, 1
        %s135 = scalar_lea.sflag [#allocation3], %s134
        %s136 = sand.u32 %s27, 1
        %s137 = smul.addr %s136, 8
        %s138 = scalar_lea.vmem [#allocation2], %s137
        // Predicated region
        $region29: #{tpu_custom_call.1} parent=27 // pred_check
          %p139 = pneg %p40
        $region30: #{tpu_custom_call.1} parent=27 // pred_check_branch
          %141 = sbr.rel (%p139) target = $region32
        $region31: #{tpu_custom_call.1} parent=27 // pred_region
          %142 = dma.done %s135, 128
        $region32: #{tpu_custom_call.1} parent=27 // pred_fallthru
          _
        %s143 = sand.u32 %s27, 1
        %s144 = scalar_lea.sflag [#allocation3], %s143
        %s145 = sand.u32 %s27, 1
        %s146 = smul.addr %s145, 8
        %s147 = scalar_lea.vmem [#allocation2], %s146
        %p148 = pneg %p40
        %p149 = pneg %p37
        %p150 = pneg %p61
        %p151 = pneg %p58
        %p152 = pneg %p87
        %p153 = pneg %p84
        %s154 = sand.u32 %s74, 1
        %s155 = scalar_lea.sflag [#allocation4], %s154
        %s156 = sand.u32 %s74, 1
        %s157 = smul.addr %s156, 8
        %s158 = scalar_lea.vmem [#allocation5], %s157
        %v159 = vld [vmem:[%s138] sm:$0xff]
        %v160 = vld [vmem:[%s1] sm:$0x1]
        %v162 = vlaneseq
        %v163 = vshrl.u32 %v162, 7
        %v164 = vsub.s32 0, %v163
        %v165 = vrot.slane %v160, %v164
        %v167 = vmul.f32 %v159, %v165
        %168 = vst [vmem:[%s158] sm:$0xff] %v167
        %s169 = sand.u32 %s74, 1
        %s170 = scalar_lea.sflag [#allocation4], %s169
        %s171 = sand.u32 %s74, 1
        %s172 = smul.addr %s171, 8
        %s173 = scalar_lea.vmem [#allocation5], %s172
        // Predicated region
        $region33: #{tpu_custom_call.1} parent=27 // pred_check
          %p174 = pneg %p84
        $region34: #{tpu_custom_call.1} parent=27 // pred_check_branch
          %176 = sbr.rel (%p174) target = $region36
        $region35: #{tpu_custom_call.1} parent=27 // pred_region
          %s178 = ssub.s32 128, 128
          %179 = vsyncadd %s170, %s178
          %s180 = smul.addr %s19, 128
          %s181 = scalar_lea.hbm %s2, %s180
          %s183 = sshll.u32 %s173, 4
          %s184 = int_to_ptr.vmem [resolvable:$true] %s183
          %186 = dma.vmem_to_hbm [thread:$0]  %s184, 128, %s181, %s170
        $region36: #{tpu_custom_call.1} parent=27 // pred_fallthru
          _
      $region28: #{tpu_custom_call.1} parent=5 // pred_fallthru
        _
      %p187 = scmp.le.s32.totalorder 2, %s14
      // Predicated region
      $region37: #{tpu_custom_call.1} parent=5 // pred_check
        %p188 = pneg %p187
      $region38: #{tpu_custom_call.1} parent=5 // pred_check_branch
        %190 = sbr.rel (%p188) target = $region40
      $region39: #{tpu_custom_call.1} parent=5 // pred_region
        %s191 = ssub.s32 %s14, 2
        // Predicated region
        $region41: #{tpu_custom_call.1} parent=39 // pred_check
          %p192 = pneg %p90
        $region42: #{tpu_custom_call.1} parent=39 // pred_check_branch
          %194 = sbr.rel (%p192) target = $region44
        $region43: #{tpu_custom_call.1} parent=39 // pred_region
          %s195 = sand.u32 %s75, 1
          %s196 = scalar_lea.sflag [#allocation4], %s195
          %s197 = sand.u32 %s75, 1
          %s198 = smul.addr %s197, 8
          %s199 = scalar_lea.vmem [#allocation5], %s198
          %200 = dma.done %s196, 128
        $region44: #{tpu_custom_call.1} parent=39 // pred_fallthru
          _
      $region40: #{tpu_custom_call.1} parent=5 // pred_fallthru
        _
    $region6: #{tpu_custom_call.1} parent=1 // loop_footer
      %s18 = sadd.s32 1, %s14
    $region7: #{tpu_custom_call.1} parent=1 // loop_footer_branch
      %13 = sbr.rel target = $region3
    $region8: #{tpu_custom_call.1} parent=1 // loop_exit
      _
    %201 = vsyncpa [#allocation3], 1
    %s202 = scalar_lea.sflag [#allocation3], 1
    %203 = vsyncpa %s202, 1
    %204 = vsyncpa [#allocation4], 1
    %s205 = scalar_lea.sflag [#allocation4], 1
    %206 = vsyncpa %s205, 1

</llo_original>
